<compile_context>
chip_gen: v7x
topology: tpu7x:2x2x1
jax: 0.10.0
libtpu: 0.0.40
codegen_flags: <defaults>
</compile_context>

<pallas_src>
import functools

import jax
import jax.numpy as jnp
from jax.experimental import pallas as pl
from jax.experimental.pallas import tpu as pltpu

LANE = 128


def _round_up(n, m):
    return ((n + m - 1) // m) * m


def _policy_net_kernel(x_ref, w1_ref, b1_ref, w2_ref, b2_ref, wh_ref, bh_ref,
                       pol_ref, val_ref, *, output_dim):
    """One batch tile: fused fc1 -> fc2 -> (policy+value) head -> masked softmax."""
    x = x_ref[...]
    # Hoist bias loads (loaded exactly once; reused below).
    b1 = b1_ref[...]
    b2 = b2_ref[...]
    bh = bh_ref[...]

    # fc1 + relu
    h1 = jnp.dot(x, w1_ref[...], preferred_element_type=jnp.float32) + b1
    h1 = jnp.maximum(h1, 0.0)

    # fc2 + relu
    h2 = jnp.dot(h1, w2_ref[...], preferred_element_type=jnp.float32) + b2
    h2 = jnp.maximum(h2, 0.0)

    # Fused head: columns [0, output_dim) are policy logits, column output_dim
    # is the value, remaining (few) columns are zero padding.
    head = jnp.dot(h2, wh_ref[...], preferred_element_type=jnp.float32) + bh

    col = jax.lax.broadcasted_iota(jnp.int32, head.shape, dimension=1)
    is_logit = col < output_dim

    # Softmax over the real policy columns only (value + padding columns masked
    # to a large negative value so exp() underflows to 0).
    logits = jnp.where(is_logit, head, jnp.float32(-1e30))
    m = jnp.max(logits, axis=-1, keepdims=True)
    e = jnp.exp(logits - m)
    s = jnp.sum(e, axis=-1, keepdims=True)
    inv = pl.reciprocal(s, approx=True)        # EUP vrcp (free slot)
    inv = inv * (2.0 - s * inv)                # one Newton step -> f32-exact
    probs = e * inv

    pol_ref[...] = probs[:, :output_dim].astype(pol_ref.dtype)
    val_ref[...] = head[:, output_dim:output_dim + 1].astype(val_ref.dtype)


def prepare_policy_net_params(params):
    """One-time prep: pad weights to lane-aligned shapes and fuse the two heads.

    Do this ONCE (outside the per-step path); `policy_net_forward` then launches
    only the kernel with no per-call padding/concat of parameters.
    """
    input_dim, hidden_dim = params["w1"].shape
    output_dim = params["wp"].shape[1]

    hid_p = _round_up(hidden_dim, LANE)
    head_p = _round_up(output_dim + 1, 8)      # policy logits + 1 value column

    def pad2(a, rows, cols):
        return jnp.pad(a, ((0, rows - a.shape[0]), (0, cols - a.shape[1])))

    # Padded hidden lanes get zero weight and zero bias, so they remain exactly
    # 0 through the ReLUs and contribute nothing downstream.
    w1 = pad2(params["w1"].astype(jnp.float32), input_dim, hid_p)
    b1 = pad2(params["b1"].astype(jnp.float32), 1, hid_p)
    w2 = pad2(params["w2"].astype(jnp.float32), hid_p, hid_p)
    b2 = pad2(params["b2"].astype(jnp.float32), 1, hid_p)
    wh = pad2(jnp.concatenate([params["wp"], params["wv"]], axis=1).astype(jnp.float32),
              hid_p, head_p)
    bh = pad2(jnp.concatenate([params["bp"], params["bv"]], axis=1).astype(jnp.float32),
              1, head_p)

    return {"w1": w1, "b1": b1, "w2": w2, "b2": b2, "wh": wh, "bh": bh,
            "input_dim": input_dim, "hidden_dim": hidden_dim,
            "output_dim": output_dim}


def policy_net_forward(x, prep, *, block_rows=1024):
    """x: [B, input_dim] float32.  prep: output of prepare_policy_net_params.
    Returns (policy_probs [B, output_dim], value [B, 1])."""
    B, input_dim = x.shape
    assert input_dim == prep["input_dim"]
    output_dim = prep["output_dim"]
    hid_p = prep["w1"].shape[1]
    head_p = prep["wh"].shape[1]

    # Adaptive batch tiling: multiple of 8 rows, padding waste < 8 rows/step.
    rows8 = _round_up(B, 8)
    nsteps = max(1, -(-rows8 // block_rows))
    if nsteps == 1 and rows8 >= 1024:
        nsteps = 2                     # let v7x shard across both TensorCores
    blk = _round_up(-(-rows8 // nsteps), 8)
    b_pad = nsteps * blk

    xp = x.astype(jnp.float32)
    if b_pad != B:
        xp = jnp.pad(xp, ((0, b_pad - B), (0, 0)))

    def weight_spec(shape):
        # Weights/biases stay resident at block (0, 0) for every batch tile.
        return pl.BlockSpec(shape, lambda i: (0, 0), memory_space=pltpu.VMEM)

    kernel = functools.partial(_policy_net_kernel, output_dim=output_dim)

    pol, val = pl.pallas_call(
        kernel,
        out_shape=(jax.ShapeDtypeStruct((b_pad, output_dim), jnp.float32),
                   jax.ShapeDtypeStruct((b_pad, 1), jnp.float32)),
        grid=(nsteps,),
        in_specs=[
            pl.BlockSpec((blk, input_dim), lambda i: (i, 0), memory_space=pltpu.VMEM),
            weight_spec((input_dim, hid_p)),
            weight_spec((1, hid_p)),
            weight_spec((hid_p, hid_p)),
            weight_spec((1, hid_p)),
            weight_spec((hid_p, head_p)),
            weight_spec((1, head_p)),
        ],
        out_specs=(
            pl.BlockSpec((blk, output_dim), lambda i: (i, 0), memory_space=pltpu.VMEM),
            pl.BlockSpec((blk, 1), lambda i: (i, 0), memory_space=pltpu.VMEM),
        ),
        compiler_params=pltpu.CompilerParams(
            dimension_semantics=("parallel",)),
    )(xp, prep["w1"], prep["b1"], prep["w2"], prep["b2"], prep["wh"], prep["bh"])

    if b_pad != B:
        pol = pol[:B]
        val = val[:B]
    return pol, val


def init_policy_net_params(key, input_dim, hidden_dim, output_dim):
    """Deterministic init mimicking nn.Linear (uniform +-1/sqrt(fan_in)).
    Weights are stored as [in, out] (transpose of PyTorch's [out, in])."""
    ks = jax.random.split(key, 8)

    def linear(kw, kb, fan_in, fan_out):
        bound = 1.0 / jnp.sqrt(jnp.float32(fan_in))
        w = jax.random.uniform(kw, (fan_in, fan_out), jnp.float32, -bound, bound)
        b = jax.random.uniform(kb, (1, fan_out), jnp.float32, -bound, bound)
        return w, b

    w1, b1 = linear(ks[0], ks[1], input_dim, hidden_dim)
    w2, b2 = linear(ks[2], ks[3], hidden_dim, hidden_dim)
    wp, bp = linear(ks[4], ks[5], hidden_dim, output_dim)
    wv, bv = linear(ks[6], ks[7], hidden_dim, 1)
    return {"w1": w1, "b1": b1, "w2": w2, "b2": b2,
            "wp": wp, "bp": bp, "wv": wv, "bv": bv}


def policy_net_ref(x, p):
    """Pure-JAX reference for correctness checking."""
    h1 = jax.nn.relu(x @ p["w1"] + p["b1"])
    h2 = jax.nn.relu(h1 @ p["w2"] + p["b2"])
    pol = jax.nn.softmax(h2 @ p["wp"] + p["bp"], axis=-1)
    val = h2 @ p["wv"] + p["bv"]
    return pol, val


if __name__ == "__main__":
    key = jax.random.PRNGKey(0)
    k_params, k_x1, k_x2 = jax.random.split(key, 3)

    batch, input_dim, hidden_dim, output_dim = 8, 16, 32, 8
    params = init_policy_net_params(k_params, input_dim, hidden_dim, output_dim)
    prep = prepare_policy_net_params(params)          # one-time padding/fusion

    # Case 1: batch that is already a multiple of 8 (no padding path).
    x = jax.random.normal(k_x1, (batch, input_dim), dtype=jnp.float32)
    pol, val = policy_net_forward(x, prep)
    jax.block_until_ready((pol, val))

    pol_ref, val_ref = policy_net_ref(x, params)
    assert pol.shape == (batch, output_dim) and val.shape == (batch, 1)
    assert jnp.allclose(pol, pol_ref, atol=1e-5, rtol=1e-5)
    assert jnp.allclose(val, val_ref, atol=1e-5, rtol=1e-5)
    assert jnp.allclose(jnp.sum(pol, axis=-1), 1.0, atol=1e-5)

    # Case 2: ragged batch (exercises the row-padding + slice path).
    batch2 = 20
    x2 = jax.random.normal(k_x2, (batch2, input_dim), dtype=jnp.float32)
    pol2, val2 = policy_net_forward(x2, prep)
    jax.block_until_ready((pol2, val2))
    pol2_ref, val2_ref = policy_net_ref(x2, params)
    assert pol2.shape == (batch2, output_dim) and val2.shape == (batch2, 1)
    assert jnp.allclose(pol2, pol2_ref, atol=1e-5, rtol=1e-5)
    assert jnp.allclose(val2, val2_ref, atol=1e-5, rtol=1e-5)

    print("KERNEL_OK")
</pallas_src>

<mosaic_0001>
module attributes {stable_mosaic.version = 11 : i64} {
  func.func @_policy_net_kernel(%arg0: i32, %arg1: memref<8x16xf32, #tpu.memory_space<vmem>>, %arg2: memref<16x128xf32, #tpu.memory_space<vmem>>, %arg3: memref<1x128xf32, #tpu.memory_space<vmem>>, %arg4: memref<128x128xf32, #tpu.memory_space<vmem>>, %arg5: memref<1x128xf32, #tpu.memory_space<vmem>>, %arg6: memref<128x16xf32, #tpu.memory_space<vmem>>, %arg7: memref<1x16xf32, #tpu.memory_space<vmem>>, %arg8: memref<8x8xf32, #tpu.memory_space<vmem>>, %arg9: memref<8x1xf32, #tpu.memory_space<vmem>>) attributes {dimension_semantics = [#tpu.dimension_semantics<parallel>], iteration_bounds = array<i64: 1>, scalar_prefetch = 0 : i64, scratch_operands = 0 : i64, tpu.core_type = #tpu.core_type<tc>, window_params = [{transform_indices = @transform_0, window_bounds = array<i64: 8, 16>}, {pipeline_mode = #tpu.pipeline_mode<synchronous>, transform_indices = @transform_1, window_bounds = array<i64: 16, 128>}, {pipeline_mode = #tpu.pipeline_mode<synchronous>, transform_indices = @transform_2, window_bounds = array<i64: 1, 128>}, {pipeline_mode = #tpu.pipeline_mode<synchronous>, transform_indices = @transform_3, window_bounds = array<i64: 128, 128>}, {pipeline_mode = #tpu.pipeline_mode<synchronous>, transform_indices = @transform_4, window_bounds = array<i64: 1, 128>}, {pipeline_mode = #tpu.pipeline_mode<synchronous>, transform_indices = @transform_5, window_bounds = array<i64: 128, 16>}, {pipeline_mode = #tpu.pipeline_mode<synchronous>, transform_indices = @transform_6, window_bounds = array<i64: 1, 16>}, {transform_indices = @transform_7, window_bounds = array<i64: 8, 8>}, {transform_indices = @transform_8, window_bounds = array<i64: 8, 1>}]} {
    %c0 = arith.constant 0 : index
    %c0_0 = arith.constant 0 : index
    %0 = vector.load %arg1[%c0, %c0_0] : memref<8x16xf32, #tpu.memory_space<vmem>>, vector<8x16xf32>
    %c0_1 = arith.constant 0 : index
    %c0_2 = arith.constant 0 : index
    %1 = vector.load %arg3[%c0_1, %c0_2] : memref<1x128xf32, #tpu.memory_space<vmem>>, vector<1x128xf32>
    %c0_3 = arith.constant 0 : index
    %c0_4 = arith.constant 0 : index
    %2 = vector.load %arg5[%c0_3, %c0_4] : memref<1x128xf32, #tpu.memory_space<vmem>>, vector<1x128xf32>
    %c0_5 = arith.constant 0 : index
    %c0_6 = arith.constant 0 : index
    %3 = vector.load %arg7[%c0_5, %c0_6] : memref<1x16xf32, #tpu.memory_space<vmem>>, vector<1x16xf32>
    %c0_7 = arith.constant 0 : index
    %c0_8 = arith.constant 0 : index
    %4 = vector.load %arg2[%c0_7, %c0_8] : memref<16x128xf32, #tpu.memory_space<vmem>>, vector<16x128xf32>
    %cst = arith.constant dense<0.000000e+00> : vector<8x128xf32>
    %5 = tpu.matmul %0, %4, %cst {dimension_numbers = #tpu.dot_dimension_numbers<[1], [0], [0], [1], [0, 0, 1, 1], [], []>} : vector<8x16xf32>, vector<16x128xf32>, vector<8x128xf32> -> vector<8x128xf32>
    %6 = vector.broadcast %1 : vector<1x128xf32> to vector<8x128xf32>
    %7 = arith.addf %5, %6 : vector<8x128xf32>
    %cst_9 = arith.constant 0.000000e+00 : f32
    %8 = vector.broadcast %cst_9 : f32 to vector<8x128xf32>
    %9 = arith.maximumf %7, %8 : vector<8x128xf32>
    %c0_10 = arith.constant 0 : index
    %c0_11 = arith.constant 0 : index
    %10 = vector.load %arg4[%c0_10, %c0_11] : memref<128x128xf32, #tpu.memory_space<vmem>>, vector<128x128xf32>
    %cst_12 = arith.constant dense<0.000000e+00> : vector<8x128xf32>
    %11 = tpu.matmul %9, %10, %cst_12 {dimension_numbers = #tpu.dot_dimension_numbers<[1], [0], [0], [1], [0, 0, 1, 1], [], []>} : vector<8x128xf32>, vector<128x128xf32>, vector<8x128xf32> -> vector<8x128xf32>
    %12 = vector.broadcast %2 : vector<1x128xf32> to vector<8x128xf32>
    %13 = arith.addf %11, %12 : vector<8x128xf32>
    %cst_13 = arith.constant 0.000000e+00 : f32
    %14 = vector.broadcast %cst_13 : f32 to vector<8x128xf32>
    %15 = arith.maximumf %13, %14 : vector<8x128xf32>
    %c0_14 = arith.constant 0 : index
    %c0_15 = arith.constant 0 : index
    %16 = vector.load %arg6[%c0_14, %c0_15] : memref<128x16xf32, #tpu.memory_space<vmem>>, vector<128x16xf32>
    %cst_16 = arith.constant dense<0.000000e+00> : vector<8x16xf32>
    %17 = tpu.matmul %15, %16, %cst_16 {dimension_numbers = #tpu.dot_dimension_numbers<[1], [0], [0], [1], [0, 0, 1, 1], [], []>} : vector<8x128xf32>, vector<128x16xf32>, vector<8x16xf32> -> vector<8x16xf32>
    %18 = vector.broadcast %3 : vector<1x16xf32> to vector<8x16xf32>
    %19 = arith.addf %17, %18 : vector<8x16xf32>
    %20 = tpu.iota {dimensions = array<i32: 1>} : vector<8x16xi32>
    %c8_i32 = arith.constant 8 : i32
    %21 = vector.broadcast %c8_i32 : i32 to vector<8x16xi32>
    %22 = arith.cmpi slt, %20, %21 : vector<8x16xi32>
    %cst_17 = arith.constant -1.000000e+30 : f32
    %23 = vector.broadcast %cst_17 : f32 to vector<8x16xf32>
    %24 = arith.select %22, %19, %23 : vector<8x16xi1>, vector<8x16xf32>
    %cst_18 = arith.constant dense<0xFF800000> : vector<8xf32>
    %25 = vector.multi_reduction <maximumf>, %24, %cst_18 [1] : vector<8x16xf32> to vector<8xf32>
    %26 = vector.shape_cast %25 : vector<8xf32> to vector<8x1xf32>
    %27 = vector.broadcast %26 : vector<8x1xf32> to vector<8x16xf32>
    %28 = arith.subf %24, %27 : vector<8x16xf32>
    %29 = math.exp %28 : vector<8x16xf32>
    %cst_19 = arith.constant dense<0.000000e+00> : vector<8xf32>
    %30 = vector.multi_reduction <add>, %29, %cst_19 [1] : vector<8x16xf32> to vector<8xf32>
    %31 = vector.shape_cast %30 : vector<8xf32> to vector<8x1xf32>
    %32 = tpu.reciprocal %31 {approx = true} : vector<8x1xf32> -> vector<8x1xf32>
    %33 = arith.mulf %31, %32 : vector<8x1xf32>
    %cst_20 = arith.constant 2.000000e+00 : f32
    %34 = vector.broadcast %cst_20 : f32 to vector<8x1xf32>
    %35 = arith.subf %34, %33 : vector<8x1xf32>
    %36 = arith.mulf %32, %35 : vector<8x1xf32>
    %37 = vector.broadcast %36 : vector<8x1xf32> to vector<8x16xf32>
    %38 = arith.mulf %29, %37 : vector<8x16xf32>
    %39 = vector.extract_strided_slice %38 {offsets = [0, 0], sizes = [8, 8], strides = [1, 1]} : vector<8x16xf32> to vector<8x8xf32>
    %c0_21 = arith.constant 0 : index
    %c0_22 = arith.constant 0 : index
    %40 = vector.load %arg8[%c0_21, %c0_22] : memref<8x8xf32, #tpu.memory_space<vmem>>, vector<8x8xf32>
    tpu.vector_store %arg8[%c0_21, %c0_22], %39 {strides = array<i32>} : memref<8x8xf32, #tpu.memory_space<vmem>>, vector<8x8xf32>,
    %41 = vector.extract_strided_slice %19 {offsets = [0, 8], sizes = [8, 1], strides = [1, 1]} : vector<8x16xf32> to vector<8x1xf32>
    %c0_23 = arith.constant 0 : index
    %c0_24 = arith.constant 0 : index
    %42 = vector.load %arg9[%c0_23, %c0_24] : memref<8x1xf32, #tpu.memory_space<vmem>>, vector<8x1xf32>
    tpu.vector_store %arg9[%c0_23, %c0_24], %41 {strides = array<i32>} : memref<8x1xf32, #tpu.memory_space<vmem>>, vector<8x1xf32>,
    return
  }
  func.func @transform_0(%arg0: i32) -> (i32, i32) {
    %c0_i32 = arith.constant 0 : i32
    %c0_i32_0 = arith.constant 0 : i32
    return %arg0, %c0_i32 : i32, i32
  }
  func.func @transform_1(%arg0: i32) -> (i32, i32) {
    %c0_i32 = arith.constant 0 : i32
    %c0_i32_0 = arith.constant 0 : i32
    %c0_i32_1 = arith.constant 0 : i32
    return %c0_i32, %c0_i32_0 : i32, i32
  }
  func.func @transform_2(%arg0: i32) -> (i32, i32) {
    %c0_i32 = arith.constant 0 : i32
    %c0_i32_0 = arith.constant 0 : i32
    %c0_i32_1 = arith.constant 0 : i32
    return %c0_i32, %c0_i32_0 : i32, i32
  }
  func.func @transform_3(%arg0: i32) -> (i32, i32) {
    %c0_i32 = arith.constant 0 : i32
    %c0_i32_0 = arith.constant 0 : i32
    %c0_i32_1 = arith.constant 0 : i32
    return %c0_i32, %c0_i32_0 : i32, i32
  }
  func.func @transform_4(%arg0: i32) -> (i32, i32) {
    %c0_i32 = arith.constant 0 : i32
    %c0_i32_0 = arith.constant 0 : i32
    %c0_i32_1 = arith.constant 0 : i32
    return %c0_i32, %c0_i32_0 : i32, i32
  }
  func.func @transform_5(%arg0: i32) -> (i32, i32) {
    %c0_i32 = arith.constant 0 : i32
    %c0_i32_0 = arith.constant 0 : i32
    %c0_i32_1 = arith.constant 0 : i32
    return %c0_i32, %c0_i32_0 : i32, i32
  }
  func.func @transform_6(%arg0: i32) -> (i32, i32) {
    %c0_i32 = arith.constant 0 : i32
    %c0_i32_0 = arith.constant 0 : i32
    %c0_i32_1 = arith.constant 0 : i32
    return %c0_i32, %c0_i32_0 : i32, i32
  }
  func.func @transform_7(%arg0: i32) -> (i32, i32) {
    %c0_i32 = arith.constant 0 : i32
    %c0_i32_0 = arith.constant 0 : i32
    return %arg0, %c0_i32 : i32, i32
  }
  func.func @transform_8(%arg0: i32) -> (i32, i32) {
    %c0_i32 = arith.constant 0 : i32
    %c0_i32_0 = arith.constant 0 : i32
    return %arg0, %c0_i32 : i32, i32
  }
}

</mosaic_0001>

<llo_original>
// kernel: tpu_custom_call.1
$region0: #{tpu_custom_call.1}
  #allocation0 [shape = 'u32[]', space=smem, size = 0x4, offset = 0x4, fixed_abs, tag = 'smem constant byte address 0x4 - core index']
  #allocation1 [shape = 'u32[144,128]{1,0:T(1,128)}', space=vmem, size = 0x12000, scoped, tag = 'internal scratch']
  %s0 = inlined_call_operand.hbm [shape: f32[8,16], index: 0, kind: input, shape index: {}]
  %s1 = inlined_call_operand.vmem [shape: f32[16,128], index: 1, kind: input, shape index: {}]
  %s2 = inlined_call_operand.vmem [shape: f32[1,128], index: 2, kind: input, shape index: {}]
  %s3 = inlined_call_operand.vmem [shape: f32[128,128], index: 3, kind: input, shape index: {}]
  %s4 = inlined_call_operand.vmem [shape: f32[1,128], index: 4, kind: input, shape index: {}]
  %s5 = inlined_call_operand.vmem [shape: f32[128,16], index: 5, kind: input, shape index: {}]
  %s6 = inlined_call_operand.vmem [shape: f32[1,16], index: 6, kind: input, shape index: {}]
  %s7 = inlined_call_operand.hbm [shape: f32[8,8], index: 7, kind: output, shape index: {0}]
  %s8 = inlined_call_operand.vmem [shape: f32[8,1], index: 8, kind: output, shape index: {1}]
  %9 = xla_tuple %s7, %s8
  %s10 = sld [smem:[#allocation0]]
  $region50: #{tpu_custom_call.1} parent=0
    _
  %s12 = ssub.s32 1, %s10
  %s13 = scalar_select 0, %s12, %s10
  $region1: #{tpu_custom_call.1} parent=0
    #allocation2 [shape = 'u8[4096]{0}', space=vmem, size = 0x1000, scoped, tag = 'input window, operand 0, single buffered']
    #allocation3 [shape = 's32[1]{0}', space=sflag, size = 0x4, scoped, tag = 'scoped memory for tpu_custom_call.1']
    #allocation4 [shape = 's32[1]{0}', space=sflag, size = 0x4, scoped, tag = 'scoped memory for tpu_custom_call.1']
    #allocation5 [shape = 'u8[4096]{0}', space=vmem, size = 0x1000, scoped, tag = 'output window, operand 0, single buffered']
    %14 = vsyncpa [#allocation3], 0
    %15 = vsyncpa [#allocation4], 0
    // Predicated region
    $region2: #{tpu_custom_call.1} parent=1 // pred_check
      _
    $region3: #{tpu_custom_call.1} parent=1 // pred_check_branch
      %17 = sbr.rel (0) target = $region5
    $region4: #{tpu_custom_call.1} parent=1 // pred_region
      %s19 = ssub.s32 128, 128
      %20 = vsyncadd [#allocation3], %s19
      %s22 = sshll.u32 [#allocation2], 4
      %s23 = int_to_ptr.vmem [resolvable:$true] %s22
      %25 = dma.hbm_to_vmem [thread:$0]  %s0, 128, %s23, [#allocation3]
    $region5: #{tpu_custom_call.1} parent=1 // pred_fallthru
      _
    // Predicated region
    $region6: #{tpu_custom_call.1} parent=1 // pred_check
      _
    $region7: #{tpu_custom_call.1} parent=1 // pred_check_branch
      %27 = sbr.rel (0) target = $region9
    $region8: #{tpu_custom_call.1} parent=1 // pred_region
      _
    $region9: #{tpu_custom_call.1} parent=1 // pred_fallthru
      _
    // Predicated region
    $region10: #{tpu_custom_call.1} parent=1 // pred_check
      _
    $region11: #{tpu_custom_call.1} parent=1 // pred_check_branch
      %29 = sbr.rel (0) target = $region13
    $region12: #{tpu_custom_call.1} parent=1 // pred_region
      _
    $region13: #{tpu_custom_call.1} parent=1 // pred_fallthru
      _
    // Predicated region
    $region14: #{tpu_custom_call.1} parent=1 // pred_check
      _
    $region15: #{tpu_custom_call.1} parent=1 // pred_check_branch
      %31 = sbr.rel (0) target = $region17
    $region16: #{tpu_custom_call.1} parent=1 // pred_region
      _
    $region17: #{tpu_custom_call.1} parent=1 // pred_fallthru
      _
    // Predicated region
    $region18: #{tpu_custom_call.1} parent=1 // pred_check
      _
    $region19: #{tpu_custom_call.1} parent=1 // pred_check_branch
      %33 = sbr.rel (0) target = $region21
    $region20: #{tpu_custom_call.1} parent=1 // pred_region
      _
    $region21: #{tpu_custom_call.1} parent=1 // pred_fallthru
      _
    // Predicated region
    $region22: #{tpu_custom_call.1} parent=1 // pred_check
      _
    $region23: #{tpu_custom_call.1} parent=1 // pred_check_branch
      %35 = sbr.rel (0) target = $region25
    $region24: #{tpu_custom_call.1} parent=1 // pred_region
      _
    $region25: #{tpu_custom_call.1} parent=1 // pred_fallthru
      _
    // Predicated region
    $region26: #{tpu_custom_call.1} parent=1 // pred_check
      _
    $region27: #{tpu_custom_call.1} parent=1 // pred_check_branch
      %37 = sbr.rel (0) target = $region29
    $region28: #{tpu_custom_call.1} parent=1 // pred_region
      _
    $region29: #{tpu_custom_call.1} parent=1 // pred_fallthru
      _
    // Predicated region
    $region30: #{tpu_custom_call.1} parent=1 // pred_check
      _
    $region31: #{tpu_custom_call.1} parent=1 // pred_check_branch
      %39 = sbr.rel (0) target = $region33
    $region32: #{tpu_custom_call.1} parent=1 // pred_region
      %40 = dma.done [#allocation3], 128
    $region33: #{tpu_custom_call.1} parent=1 // pred_fallthru
      _
    %v41 = vld [vmem:[#allocation2] sm:$0xff]
    %v42 = vld [vmem:[%s2] sm:$0x1]
    %v43 = vld [vmem:[%s4] sm:$0x1]
    %v44 = vld [vmem:[%s6] sm:$0x1]
    %v45 = vld [vmem:[%s1] sm:$0xff]
    %v46 = vld [vmem:[%s1 + $0x8] sm:$0xff]
    %v48 = vlaneseq
    %v49 = vshrl.u32 %v48, 7
    %v50 = vsub.s32 0, %v49
    %v51 = vrot.slane %v42, %v50
    %vm53 = vcmask 130048
    %v55 = vsel %vm53, %v41, 0
    %57 = vmatprep.subr.mxu0 0.0
    %58 = vmatpush1.msra.mxu0 %v45
    %59 = vmatprep.subr.mxu0 0.0
    %60 = vmatpush1.msra.mxu0 %v46
    %61 = vmatprep.subr.mxu0 0.0
    %62 = vmatpush1.msra.mxu0 0.0
    %63 = vmatprep.subr.mxu0 0.0
    %64 = vmatpush1.msra.mxu0 0.0
    %65 = vmatprep.subr.mxu0 0.0
    %66 = vmatpush1.msra.mxu0 0.0
    %67 = vmatprep.subr.mxu0 0.0
    %68 = vmatpush1.msra.mxu0 0.0
    %69 = vmatprep.subr.mxu0 0.0
    %70 = vmatpush1.msra.mxu0 0.0
    %71 = vmatprep.subr.mxu0 0.0
    %72 = vmatpush1.msra.mxu0 0.0
    %73 = vmatprep.subr.mxu0 0.0
    %74 = vmatpush1.msra.mxu0 0.0
    %75 = vmatprep.subr.mxu0 0.0
    %76 = vmatpush1.msra.mxu0 0.0
    %77 = vmatprep.subr.mxu0 0.0
    %78 = vmatpush1.msra.mxu0 0.0
    %79 = vmatprep.subr.mxu0 0.0
    %80 = vmatpush1.msra.mxu0 0.0
    %81 = vmatprep.subr.mxu0 0.0
    %82 = vmatpush1.msra.mxu0 0.0
    %83 = vmatprep.subr.mxu0 0.0
    %84 = vmatpush1.msra.mxu0 0.0
    %85 = vmatprep.subr.mxu0 0.0
    %86 = vmatpush1.msra.mxu0 0.0
    %87 = vmatprep.subr.mxu0 0.0
    %88 = vmatpush1.msra.mxu0 0.0
    %89 = vmatprep.subr.mxu0 0.0
    %90 = vmatpush1.msra.mxu0 0.0
    %91 = vmatprep.subr.mxu0 0.0
    %92 = vmatpush1.msra.mxu0 0.0
    %93 = vmatprep.subr.mxu0 0.0
    %94 = vmatpush1.msra.mxu0 0.0
    %95 = vmatprep.subr.mxu0 0.0
    %96 = vmatpush1.msra.mxu0 0.0
    %97 = vmatprep.subr.mxu0 0.0
    %98 = vmatpush1.msra.mxu0 0.0
    %99 = vmatprep.subr.mxu0 0.0
    %100 = vmatpush1.msra.mxu0 0.0
    %101 = vmatprep.subr.mxu0 0.0
    %102 = vmatpush1.msra.mxu0 0.0
    %103 = vmatprep.subr.mxu0 0.0
    %104 = vmatpush1.msra.mxu0 0.0
    %105 = vmatprep.subr.mxu0 0.0
    %106 = vmatpush1.msra.mxu0 0.0
    %107 = vmatprep.subr.mxu0 0.0
    %108 = vmatpush1.msra.mxu0 0.0
    %109 = vmatprep.subr.mxu0 0.0
    %110 = vmatpush1.msra.mxu0 0.0
    %111 = vmatprep.subr.mxu0 0.0
    %112 = vmatpush1.msra.mxu0 0.0
    %113 = vmatprep.subr.mxu0 0.0
    %114 = vmatpush1.msra.mxu0 0.0
    %115 = vmatprep.subr.mxu0 0.0
    %116 = vmatpush1.msra.mxu0 0.0
    %117 = vmatprep.subr.mxu0 0.0
    %118 = vmatpush1.msra.mxu0 0.0
    %119 = vmatprep.subr.mxu0 0.0
    %120 = vmatpush1.msra.mxu0 0.0
    %121 = vmatprep.mubr.f32.mxu0 0.0
    %122 = vmatmul.mubr.f32.gmra.mrb[0].mxu0 %v55
    %v123 = vpop.f32.mrb[0].mxu0
    %v124 = vadd.f32 %v51, %v123
    %v125 = vpop.f32.mrb[0].mxu0
    %126 = vdwg.mxu0
    %v127 = vmax.f32 %v124, 0.0
    %v128 = vld [vmem:[%s3] sm:$0xff]
    %v129 = vld [vmem:[%s3 + $0x8] sm:$0xff]
    %v130 = vld [vmem:[%s3 + $0x10] sm:$0xff]
    %v131 = vld [vmem:[%s3 + $0x18] sm:$0xff]
    %v132 = vld [vmem:[%s3 + $0x20] sm:$0xff]
    %v133 = vld [vmem:[%s3 + $0x28] sm:$0xff]
    %v134 = vld [vmem:[%s3 + $0x30] sm:$0xff]
    %v135 = vld [vmem:[%s3 + $0x38] sm:$0xff]
    %v136 = vld [vmem:[%s3 + $0x40] sm:$0xff]
    %v137 = vld [vmem:[%s3 + $0x48] sm:$0xff]
    %v138 = vld [vmem:[%s3 + $0x50] sm:$0xff]
    %v139 = vld [vmem:[%s3 + $0x58] sm:$0xff]
    %v140 = vld [vmem:[%s3 + $0x60] sm:$0xff]
    %v141 = vld [vmem:[%s3 + $0x68] sm:$0xff]
    %v142 = vld [vmem:[%s3 + $0x70] sm:$0xff]
    %v143 = vld [vmem:[%s3 + $0x78] sm:$0xff]
    %v145 = vlaneseq
    %v146 = vshrl.u32 %v145, 7
    %v147 = vsub.s32 0, %v146
    %v148 = vrot.slane %v43, %v147
    %150 = vmatprep.subr.mxu0 0.0
    %151 = vmatpush1.msra.mxu0 %v128
    %152 = vmatprep.subr.mxu0 0.0
    %153 = vmatpush1.msra.mxu0 %v129
    %154 = vmatprep.subr.mxu0 0.0
    %155 = vmatpush1.msra.mxu0 %v130
    %156 = vmatprep.subr.mxu0 0.0
    %157 = vmatpush1.msra.mxu0 %v131
    %158 = vmatprep.subr.mxu0 0.0
    %159 = vmatpush1.msra.mxu0 %v132
    %160 = vmatprep.subr.mxu0 0.0
    %161 = vmatpush1.msra.mxu0 %v133
    %162 = vmatprep.subr.mxu0 0.0
    %163 = vmatpush1.msra.mxu0 %v134
    %164 = vmatprep.subr.mxu0 0.0
    %165 = vmatpush1.msra.mxu0 %v135
    %166 = vmatprep.subr.mxu0 0.0
    %167 = vmatpush1.msra.mxu0 %v136
    %168 = vmatprep.subr.mxu0 0.0
    %169 = vmatpush1.msra.mxu0 %v137
    %170 = vmatprep.subr.mxu0 0.0
    %171 = vmatpush1.msra.mxu0 %v138
    %172 = vmatprep.subr.mxu0 0.0
    %173 = vmatpush1.msra.mxu0 %v139
    %174 = vmatprep.subr.mxu0 0.0
    %175 = vmatpush1.msra.mxu0 %v140
    %176 = vmatprep.subr.mxu0 0.0
    %177 = vmatpush1.msra.mxu0 %v141
    %178 = vmatprep.subr.mxu0 0.0
    %179 = vmatpush1.msra.mxu0 %v142
    %180 = vmatprep.subr.mxu0 0.0
    %181 = vmatpush1.msra.mxu0 %v143
    %182 = vmatprep.subr.mxu0 0.0
    %183 = vmatpush1.msra.mxu0 0.0
    %184 = vmatprep.subr.mxu0 0.0
    %185 = vmatpush1.msra.mxu0 0.0
    %186 = vmatprep.subr.mxu0 0.0
    %187 = vmatpush1.msra.mxu0 0.0
    %188 = vmatprep.subr.mxu0 0.0
    %189 = vmatpush1.msra.mxu0 0.0
    %190 = vmatprep.subr.mxu0 0.0
    %191 = vmatpush1.msra.mxu0 0.0
    %192 = vmatprep.subr.mxu0 0.0
    %193 = vmatpush1.msra.mxu0 0.0
    %194 = vmatprep.subr.mxu0 0.0
    %195 = vmatpush1.msra.mxu0 0.0
    %196 = vmatprep.subr.mxu0 0.0
    %197 = vmatpush1.msra.mxu0 0.0
    %198 = vmatprep.subr.mxu0 0.0
    %199 = vmatpush1.msra.mxu0 0.0
    %200 = vmatprep.subr.mxu0 0.0
    %201 = vmatpush1.msra.mxu0 0.0
    %202 = vmatprep.subr.mxu0 0.0
    %203 = vmatpush1.msra.mxu0 0.0
    %204 = vmatprep.subr.mxu0 0.0
    %205 = vmatpush1.msra.mxu0 0.0
    %206 = vmatprep.subr.mxu0 0.0
    %207 = vmatpush1.msra.mxu0 0.0
    %208 = vmatprep.subr.mxu0 0.0
    %209 = vmatpush1.msra.mxu0 0.0
    %210 = vmatprep.subr.mxu0 0.0
    %211 = vmatpush1.msra.mxu0 0.0
    %212 = vmatprep.subr.mxu0 0.0
    %213 = vmatpush1.msra.mxu0 0.0
    %214 = vmatprep.mubr.f32.mxu0 0.0
    %215 = vmatmul.mubr.f32.gmra.mrb[0].mxu0 %v127
    %v216 = vpop.f32.mrb[0].mxu0
    %v217 = vadd.f32 %v148, %v216
    %v218 = vpop.f32.mrb[0].mxu0
    %219 = vdwg.mxu0
    %v220 = vmax.f32 %v217, 0.0
    %v221 = vld [vmem:[%s5] sm:$0xff]
    %v222 = vld [vmem:[%s5 + $0x8] sm:$0xff]
    %v223 = vld [vmem:[%s5 + $0x10] sm:$0xff]
    %v224 = vld [vmem:[%s5 + $0x18] sm:$0xff]
    %v225 = vld [vmem:[%s5 + $0x20] sm:$0xff]
    %v226 = vld [vmem:[%s5 + $0x28] sm:$0xff]
    %v227 = vld [vmem:[%s5 + $0x30] sm:$0xff]
    %v228 = vld [vmem:[%s5 + $0x38] sm:$0xff]
    %v229 = vld [vmem:[%s5 + $0x40] sm:$0xff]
    %v230 = vld [vmem:[%s5 + $0x48] sm:$0xff]
    %v231 = vld [vmem:[%s5 + $0x50] sm:$0xff]
    %v232 = vld [vmem:[%s5 + $0x58] sm:$0xff]
    %v233 = vld [vmem:[%s5 + $0x60] sm:$0xff]
    %v234 = vld [vmem:[%s5 + $0x68] sm:$0xff]
    %v235 = vld [vmem:[%s5 + $0x70] sm:$0xff]
    %v236 = vld [vmem:[%s5 + $0x78] sm:$0xff]
    %v238 = vlaneseq
    %v239 = vshrl.u32 %v238, 7
    %v240 = vsub.s32 0, %v239
    %v241 = vrot.slane %v44, %v240
    %243 = vmatprep.subr.mxu0 0.0
    %244 = vmatpush1.msra.mxu0 %v221
    %245 = vmatprep.subr.mxu0 0.0
    %246 = vmatpush1.msra.mxu0 %v222
    %247 = vmatprep.subr.mxu0 0.0
    %248 = vmatpush1.msra.mxu0 %v223
    %249 = vmatprep.subr.mxu0 0.0
    %250 = vmatpush1.msra.mxu0 %v224
    %251 = vmatprep.subr.mxu0 0.0
    %252 = vmatpush1.msra.mxu0 %v225
    %253 = vmatprep.subr.mxu0 0.0
    %254 = vmatpush1.msra.mxu0 %v226
    %255 = vmatprep.subr.mxu0 0.0
    %256 = vmatpush1.msra.mxu0 %v227
    %257 = vmatprep.subr.mxu0 0.0
    %258 = vmatpush1.msra.mxu0 %v228
    %259 = vmatprep.subr.mxu0 0.0
    %260 = vmatpush1.msra.mxu0 %v229
    %261 = vmatprep.subr.mxu0 0.0
    %262 = vmatpush1.msra.mxu0 %v230
    %263 = vmatprep.subr.mxu0 0.0
    %264 = vmatpush1.msra.mxu0 %v231
    %265 = vmatprep.subr.mxu0 0.0
    %266 = vmatpush1.msra.mxu0 %v232
    %267 = vmatprep.subr.mxu0 0.0
    %268 = vmatpush1.msra.mxu0 %v233
    %269 = vmatprep.subr.mxu0 0.0
    %270 = vmatpush1.msra.mxu0 %v234
    %271 = vmatprep.subr.mxu0 0.0
    %272 = vmatpush1.msra.mxu0 %v235
    %273 = vmatprep.subr.mxu0 0.0
    %274 = vmatpush1.msra.mxu0 %v236
    %275 = vmatprep.subr.mxu0 0.0
    %276 = vmatpush1.msra.mxu0 0.0
    %277 = vmatprep.subr.mxu0 0.0
    %278 = vmatpush1.msra.mxu0 0.0
    %279 = vmatprep.subr.mxu0 0.0
    %280 = vmatpush1.msra.mxu0 0.0
    %281 = vmatprep.subr.mxu0 0.0
    %282 = vmatpush1.msra.mxu0 0.0
    %283 = vmatprep.subr.mxu0 0.0
    %284 = vmatpush1.msra.mxu0 0.0
    %285 = vmatprep.subr.mxu0 0.0
    %286 = vmatpush1.msra.mxu0 0.0
    %287 = vmatprep.subr.mxu0 0.0
    %288 = vmatpush1.msra.mxu0 0.0
    %289 = vmatprep.subr.mxu0 0.0
    %290 = vmatpush1.msra.mxu0 0.0
    %291 = vmatprep.subr.mxu0 0.0
    %292 = vmatpush1.msra.mxu0 0.0
    %293 = vmatprep.subr.mxu0 0.0
    %294 = vmatpush1.msra.mxu0 0.0
    %295 = vmatprep.subr.mxu0 0.0
    %296 = vmatpush1.msra.mxu0 0.0
    %297 = vmatprep.subr.mxu0 0.0
    %298 = vmatpush1.msra.mxu0 0.0
    %299 = vmatprep.subr.mxu0 0.0
    %300 = vmatpush1.msra.mxu0 0.0
    %301 = vmatprep.subr.mxu0 0.0
    %302 = vmatpush1.msra.mxu0 0.0
    %303 = vmatprep.subr.mxu0 0.0
    %304 = vmatpush1.msra.mxu0 0.0
    %305 = vmatprep.subr.mxu0 0.0
    %306 = vmatpush1.msra.mxu0 0.0
    %307 = vmatprep.mubr.f32.mxu0 0.0
    %308 = vmatmul.mubr.f32.gmra.mrb[0].mxu0 %v220
    %v309 = vpop.f32.mrb[0].mxu0
    %v310 = vadd.f32 %v241, %v309
    %v311 = vpop.f32.mrb[0].mxu0
    %312 = vdwg.mxu0
    %v313 = vlaneseq
    %v314 = vand.u32 %v313, 127
    %vm315 = vcmp.lt.s32.totalorder %v314, 8
    %v316 = vsel %vm315, %v310, -1e+30
    %v317 = vsel %vm53, %v316, -inf
    %318 = vmax.xlane.f32.xlu0 %v317
    %v319 = vpop.xlane.xlu0 %318
    %v320 = vsub.f32 %v316, %v319
    %v321 = vmul.f32 %v320, 1.442695
    %v322 = vpow.pop %v321
    %v323 = vsel %vm53, %v322, 0.0
    %324 = vadd.xlane.f32.xlu0 %v323
    %v325 = vpop.xlane.xlu0 %324
    %v326 = vrcp.pop %v325
    %v327 = vmul.f32 %v325, %v326
    %v328 = vsub.f32 2.0, %v327
    %v329 = vmul.f32 %v326, %v328
    %v330 = vmul.f32 %v322, %v329
    %vm331 = vcmask 64512
    %332 = vst.msk [vmem:[#allocation5] sm:$0xff] %vm331, %v330
    %334 = vrot.lane.b32.xlu0 %v310, 120
    %v335 = vpop.permute.xlu0 %334
    %vm337 = vcmask 7168
    %338 = vst.msk [vmem:[%s8] sm:$0xff] %vm337, %v335
    // Predicated region
    $region34: #{tpu_custom_call.1} parent=1 // pred_check
      _
    $region35: #{tpu_custom_call.1} parent=1 // pred_check_branch
      %340 = sbr.rel (0) target = $region37
    $region36: #{tpu_custom_call.1} parent=1 // pred_region
      %s342 = ssub.s32 128, 128
      %343 = vsyncadd [#allocation4], %s342
      %s345 = sshll.u32 [#allocation5], 4
      %s346 = int_to_ptr.vmem [resolvable:$true] %s345
      %348 = dma.vmem_to_hbm [thread:$0]  %s346, 128, %s7, [#allocation4]
    $region37: #{tpu_custom_call.1} parent=1 // pred_fallthru
      _
    // Predicated region
    $region38: #{tpu_custom_call.1} parent=1 // pred_check
      _
    $region39: #{tpu_custom_call.1} parent=1 // pred_check_branch
      %350 = sbr.rel (0) target = $region41
    $region40: #{tpu_custom_call.1} parent=1 // pred_region
      _
    $region41: #{tpu_custom_call.1} parent=1 // pred_fallthru
      _
    // Predicated region
    $region42: #{tpu_custom_call.1} parent=1 // pred_check
      _
    $region43: #{tpu_custom_call.1} parent=1 // pred_check_branch
      %352 = sbr.rel (0) target = $region45
    $region44: #{tpu_custom_call.1} parent=1 // pred_region
      %353 = dma.done [#allocation4], 128
    $region45: #{tpu_custom_call.1} parent=1 // pred_fallthru
      _
    // Predicated region
    $region46: #{tpu_custom_call.1} parent=1 // pred_check
      _
    $region47: #{tpu_custom_call.1} parent=1 // pred_check_branch
      %355 = sbr.rel (0) target = $region49
    $region48: #{tpu_custom_call.1} parent=1 // pred_region
      _
    $region49: #{tpu_custom_call.1} parent=1 // pred_fallthru
      _
    %356 = vsyncpa [#allocation3], 1
    %357 = vsyncpa [#allocation4], 1

</llo_original>
